<compile_context>
chip_gen: v6e
topology: v6e:2x2x1
jax: 0.10.0
libtpu: 0.0.40
codegen_flags: <defaults>
</compile_context>

<pallas_src>
import functools

import jax
import jax.numpy as jnp
from jax.experimental import pallas as pl
from jax.experimental.pallas import tpu as pltpu

_VMEM_LIMIT = 48 * 1024 * 1024  # fits v7x's 64 MiB physical VMEM with headroom


# --------------------------------------------------------------------------- #
# Kernel 1: conditioning MLP   emb = Linear2(SiLU(Linear1(cond)))             #
# --------------------------------------------------------------------------- #
def _cond_mlp_kernel(cond_ref, w1_ref, b1_ref, w2_ref, b2_ref, emb_ref):
    # Both matmuls accumulate in f32 on the MXU; SiLU's sigmoid goes to the EUP.
    h = jnp.dot(cond_ref[...], w1_ref[...], preferred_element_type=jnp.float32)
    h = h + b1_ref[...].astype(jnp.float32)
    h = h * jax.nn.sigmoid(h)                                     # SiLU
    emb = jnp.dot(h.astype(w2_ref.dtype), w2_ref[...],
                  preferred_element_type=jnp.float32)
    emb = emb + b2_ref[...].astype(jnp.float32)
    emb_ref[...] = emb.astype(emb_ref.dtype)


# --------------------------------------------------------------------------- #
# Kernel 2: LayerNorm (no affine, eps) + adaLN-Zero modulation                 #
# --------------------------------------------------------------------------- #
def _ln_mod_kernel(mod_ref, x_ref, xo_ref, *, eps: float, tail_dtype):
    x = x_ref[...].astype(jnp.float32)                            # (B, Tt, D)
    d = x.shape[-1]
    # One-pass statistics: sum(x) and sum(x*x) together, var = E[x^2] - mean^2.
    s1 = jnp.sum(x, axis=-1, keepdims=True)
    s2 = jnp.sum(x * x, axis=-1, keepdims=True)
    mean = s1 * (1.0 / d)
    var = s2 * (1.0 / d) - mean * mean                            # biased variance
    inv = jax.lax.rsqrt(var + eps)                                # EUP

    mod = mod_ref[...]                                            # (B, 2, D)
    shift = mod[:, 0, :].astype(jnp.float32)
    scale = mod[:, 1, :].astype(jnp.float32)

    # Elementwise tail (and the store) in bf16 when the output is bf16.
    xn = ((x - mean) * inv).astype(tail_dtype)
    w = (1.0 + scale).astype(tail_dtype)[:, None, :]
    b = shift.astype(tail_dtype)[:, None, :]
    xo_ref[...] = (xn * w + b).astype(xo_ref.dtype)


# --------------------------------------------------------------------------- #
# Wrapper                                                                      #
# --------------------------------------------------------------------------- #
def _pick_t_tile(B, T, D, itemsize, target_bytes=2 * 1024 * 1024):
    """~2 MiB x-blocks: big enough to amortize per-step overhead, small enough
    to double-buffer comfortably inside v7x's 64 MiB VMEM."""
    t = target_bytes // max(1, B * D * itemsize)
    t = max(8, (t // 8) * 8)          # second-minor block dim must be 8-aligned
    return T if t >= T else t


def ada_layer_norm_zero(x, cond, w1, b1, w2, b2, *, eps: float = 1e-6):
    """x: (B, T, D), cond: (B, D), w1: (D, D) in->out, w2: (D, 6D) in->out."""
    # TODO(synk): the PyTorch `cond=None -> cond=x` fallback only makes sense for
    # 2-D x; here we require an explicit (B, D) conditioning tensor.
    B, T, D = x.shape
    assert cond.shape == (B, D), cond.shape
    assert w1.shape == (D, D) and b1.shape == (D,)
    assert w2.shape == (D, 6 * D) and b2.shape == (6 * D,)

    out_dtype = x.dtype
    itemsize = jnp.dtype(out_dtype).itemsize
    b1_2d = b1.reshape(1, D)
    b2_2d = b2.reshape(1, 6 * D)

    # ---- 1) Conditioning MLP (tiny; keeps w2 out of the LN kernel's VMEM). --
    w2_bytes = w2.size * jnp.dtype(w2.dtype).itemsize
    chunked = (D % 128 == 0) and (w2_bytes > 8 * 1024 * 1024)
    n_h = 6 if chunked else 1
    cond_cost = pl.CostEstimate(
        flops=int(2 * B * D * D * n_h + 2 * B * D * 6 * D),
        transcendentals=int(B * D * n_h),
        bytes_accessed=int(cond.size * cond.dtype.itemsize
                           + w1.size * w1.dtype.itemsize + b1.size * b1.dtype.itemsize
                           + w2_bytes + b2.size * b2.dtype.itemsize
                           + B * 6 * D * itemsize),
    )
    if chunked:
        # Grid over the 6 output chunks; h is recomputed per step (negligible
        # MXU work) so the axis stays "parallel" and only a (D, D) slice of w2
        # is resident per step.
        emb = pl.pallas_call(
            _cond_mlp_kernel,
            out_shape=jax.ShapeDtypeStruct((B, 6 * D), out_dtype),
            grid=(6,),
            in_specs=[
                pl.BlockSpec((B, D), lambda j: (0, 0)),       # cond (resident)
                pl.BlockSpec((D, D), lambda j: (0, 0)),       # w1   (resident)
                pl.BlockSpec((1, D), lambda j: (0, 0)),       # b1   (resident)
                pl.BlockSpec((D, D), lambda j: (0, j)),       # w2 chunk
                pl.BlockSpec((1, D), lambda j: (0, j)),       # b2 chunk
            ],
            out_specs=pl.BlockSpec((B, D), lambda j: (0, j)),
            compiler_params=pltpu.CompilerParams(
                dimension_semantics=("parallel",),
                vmem_limit_bytes=_VMEM_LIMIT),
            cost_estimate=cond_cost,
        )(cond, w1, b1_2d, w2, b2_2d)
    else:
        emb = pl.pallas_call(
            _cond_mlp_kernel,
            out_shape=jax.ShapeDtypeStruct((B, 6 * D), out_dtype),
            in_specs=[
                pl.BlockSpec((B, D), lambda: (0, 0)),
                pl.BlockSpec((D, D), lambda: (0, 0)),
                pl.BlockSpec((1, D), lambda: (0, 0)),
                pl.BlockSpec((D, 6 * D), lambda: (0, 0)),
                pl.BlockSpec((1, 6 * D), lambda: (0, 0)),
            ],
            out_specs=pl.BlockSpec((B, 6 * D), lambda: (0, 0)),
            compiler_params=pltpu.CompilerParams(vmem_limit_bytes=_VMEM_LIMIT),
            cost_estimate=cond_cost,
        )(cond, w1, b1_2d, w2, b2_2d)

    emb3 = emb.reshape(B, 6, D)
    mod = emb3[:, 0:2, :]                                  # shift_msa, scale_msa

    # ---- 2) LayerNorm + modulation, gridded over T (memory-bound). ----------
    t_tile = _pick_t_tile(B, T, D, itemsize)
    tail_dtype = jnp.bfloat16 if out_dtype == jnp.bfloat16 else jnp.float32
    ln_kernel = functools.partial(_ln_mod_kernel, eps=eps, tail_dtype=tail_dtype)
    ln_cost = pl.CostEstimate(
        flops=int(10 * B * T * D),
        transcendentals=int(B * T),                        # rsqrt per row
        bytes_accessed=int(2 * B * T * D * itemsize + 2 * B * D * itemsize),
    )
    x_out = pl.pallas_call(
        ln_kernel,
        out_shape=jax.ShapeDtypeStruct((B, T, D), out_dtype),
        grid=(pl.cdiv(T, t_tile),),
        in_specs=[
            pl.BlockSpec((B, 2, D), lambda t: (0, 0, 0)),        # mod (resident)
            pl.BlockSpec((B, t_tile, D), lambda t: (0, t, 0)),   # x tile
        ],
        out_specs=pl.BlockSpec((B, t_tile, D), lambda t: (0, t, 0)),
        compiler_params=pltpu.CompilerParams(
            dimension_semantics=("parallel",),   # shards T across v7x's 2 TCs
            vmem_limit_bytes=_VMEM_LIMIT),
        cost_estimate=ln_cost,
    )(mod, x)

    gate_msa = emb3[:, 2, :]
    shift_mlp = emb3[:, 3, :]
    scale_mlp = emb3[:, 4, :]
    gate_mlp = emb3[:, 5, :]
    return x_out, gate_msa, shift_mlp, scale_mlp, gate_mlp


# --------------------------------------------------------------------------- #
# Pure-JAX reference mirroring the PyTorch forward                             #
# --------------------------------------------------------------------------- #
def ada_layer_norm_zero_ref(x, cond, w1, b1, w2, b2, eps: float = 1e-6):
    h = cond.astype(jnp.float32) @ w1 + b1
    h = h * jax.nn.sigmoid(h)
    emb = h @ w2 + b2
    shift_msa, scale_msa, gate_msa, shift_mlp, scale_mlp, gate_mlp = jnp.split(
        emb, 6, axis=-1)
    xf = x.astype(jnp.float32)
    mean = jnp.mean(xf, axis=-1, keepdims=True)
    var = jnp.mean((xf - mean) ** 2, axis=-1, keepdims=True)
    xn = (xf - mean) / jnp.sqrt(var + eps)
    xo = xn * (1.0 + scale_msa[:, None, :]) + shift_msa[:, None, :]
    dt = x.dtype
    return (xo.astype(dt), gate_msa.astype(dt), shift_mlp.astype(dt),
            scale_mlp.astype(dt), gate_mlp.astype(dt))


if __name__ == "__main__":
    B, T, D = 2, 8, 32  # batch, sequence, embedding_dim

    key = jax.random.PRNGKey(0)
    k1, k2, k3, k4, k5, k6 = jax.random.split(key, 6)
    x = jax.random.normal(k1, (B, T, D), dtype=jnp.float32)
    cond = jax.random.normal(k2, (B, D), dtype=jnp.float32)
    w1 = jax.random.normal(k3, (D, D), dtype=jnp.float32) / jnp.sqrt(D)
    b1 = 0.1 * jax.random.normal(k4, (D,), dtype=jnp.float32)
    w2 = jax.random.normal(k5, (D, 6 * D), dtype=jnp.float32) / jnp.sqrt(D)
    b2 = 0.1 * jax.random.normal(k6, (6 * D,), dtype=jnp.float32)

    outs = ada_layer_norm_zero(x, cond, w1, b1, w2, b2)
    outs = jax.block_until_ready(outs)

    refs = ada_layer_norm_zero_ref(x, cond, w1, b1, w2, b2)
    names = ("x", "gate_msa", "shift_mlp", "scale_mlp", "gate_mlp")
    for name, o, r in zip(names, outs, refs):
        assert o.shape == r.shape, (name, o.shape, r.shape)
        assert o.dtype == r.dtype, (name, o.dtype, r.dtype)
        assert jnp.allclose(o, r, atol=1e-4, rtol=1e-4), (
            name, float(jnp.max(jnp.abs(o.astype(jnp.float32) - r.astype(jnp.float32)))))

    print("KERNEL_OK")
</pallas_src>

<mosaic_0001>
module attributes {stable_mosaic.version = 11 : i64} {
  func.func @_cond_mlp_kernel(%arg0: memref<2x32xf32, #tpu.memory_space<vmem>>, %arg1: memref<32x32xf32, #tpu.memory_space<vmem>>, %arg2: memref<1x32xf32, #tpu.memory_space<vmem>>, %arg3: memref<32x192xf32, #tpu.memory_space<vmem>>, %arg4: memref<1x192xf32, #tpu.memory_space<vmem>>, %arg5: memref<2x192xf32, #tpu.memory_space<vmem>>) attributes {dimension_semantics = [], scalar_prefetch = 0 : i64, scratch_operands = 0 : i64, tpu.core_type = #tpu.core_type<tc>} {
    %c0 = arith.constant 0 : index
    %c0_0 = arith.constant 0 : index
    %0 = vector.load %arg0[%c0, %c0_0] : memref<2x32xf32, #tpu.memory_space<vmem>>, vector<2x32xf32>
    %c0_1 = arith.constant 0 : index
    %c0_2 = arith.constant 0 : index
    %1 = vector.load %arg1[%c0_1, %c0_2] : memref<32x32xf32, #tpu.memory_space<vmem>>, vector<32x32xf32>
    %cst = arith.constant dense<0.000000e+00> : vector<2x32xf32>
    %2 = tpu.matmul %0, %1, %cst {dimension_numbers = #tpu.dot_dimension_numbers<[1], [0], [0], [1], [0, 0, 1, 1], [], []>} : vector<2x32xf32>, vector<32x32xf32>, vector<2x32xf32> -> vector<2x32xf32>
    %c0_3 = arith.constant 0 : index
    %c0_4 = arith.constant 0 : index
    %3 = vector.load %arg2[%c0_3, %c0_4] : memref<1x32xf32, #tpu.memory_space<vmem>>, vector<1x32xf32>
    %4 = vector.broadcast %3 : vector<1x32xf32> to vector<2x32xf32>
    %5 = arith.addf %2, %4 : vector<2x32xf32>
    %6 = arith.negf %5 : vector<2x32xf32>
    %7 = math.exp %6 : vector<2x32xf32>
    %cst_5 = arith.constant 1.000000e+00 : f32
    %8 = vector.broadcast %cst_5 : f32 to vector<2x32xf32>
    %9 = arith.addf %8, %7 : vector<2x32xf32>
    %10 = arith.divf %8, %9 : vector<2x32xf32>
    %11 = arith.mulf %5, %10 : vector<2x32xf32>
    %c0_6 = arith.constant 0 : index
    %c0_7 = arith.constant 0 : index
    %12 = vector.load %arg3[%c0_6, %c0_7] : memref<32x192xf32, #tpu.memory_space<vmem>>, vector<32x192xf32>
    %cst_8 = arith.constant dense<0.000000e+00> : vector<2x192xf32>
    %13 = tpu.matmul %11, %12, %cst_8 {dimension_numbers = #tpu.dot_dimension_numbers<[1], [0], [0], [1], [0, 0, 1, 1], [], []>} : vector<2x32xf32>, vector<32x192xf32>, vector<2x192xf32> -> vector<2x192xf32>
    %c0_9 = arith.constant 0 : index
    %c0_10 = arith.constant 0 : index
    %14 = vector.load %arg4[%c0_9, %c0_10] : memref<1x192xf32, #tpu.memory_space<vmem>>, vector<1x192xf32>
    %15 = vector.broadcast %14 : vector<1x192xf32> to vector<2x192xf32>
    %16 = arith.addf %13, %15 : vector<2x192xf32>
    %c0_11 = arith.constant 0 : index
    %c0_12 = arith.constant 0 : index
    %17 = vector.load %arg5[%c0_11, %c0_12] : memref<2x192xf32, #tpu.memory_space<vmem>>, vector<2x192xf32>
    tpu.vector_store %arg5[%c0_11, %c0_12], %16 {strides = array<i32>} : memref<2x192xf32, #tpu.memory_space<vmem>>, vector<2x192xf32>,
    return
  }
}

</mosaic_0001>

<llo_original>
// kernel: tpu_custom_call.1
$region0: #{tpu_custom_call.1}
  #allocation0 [shape = 'u32[]', space=smem, size = 0x4, offset = 0x4, fixed_abs, tag = 'smem constant byte address 0x4 - core index']
  #allocation1 [shape = 'u32[144,128]{1,0:T(1,128)}', space=vmem, size = 0x12000, scoped, tag = 'internal scratch']
  %s0 = inlined_call_operand.hbm [shape: f32[2,32], index: 0, kind: input, shape index: {}]
  %s1 = inlined_call_operand.hbm [shape: f32[32,32], index: 1, kind: input, shape index: {}]
  %s2 = inlined_call_operand.vmem [shape: f32[1,32], index: 2, kind: input, shape index: {}]
  %s3 = inlined_call_operand.hbm [shape: f32[32,192], index: 3, kind: input, shape index: {}]
  %s4 = inlined_call_operand.vmem [shape: f32[1,192], index: 4, kind: input, shape index: {}]
  %s5 = inlined_call_operand.hbm [shape: f32[2,192], index: 5, kind: output, shape index: {}]
  %s6 = sld [smem:[#allocation0]]
  $region42: #{tpu_custom_call.1} parent=0
    _
  %s8 = ssub.s32 1, %s6
  %s9 = scalar_select 0, %s8, %s6
  $region1: #{tpu_custom_call.1} parent=0
    #allocation2 [shape = 'u8[1024]{0}', space=vmem, size = 0x400, scoped, tag = 'input window, operand 0, single buffered']
    #allocation3 [shape = 's32[1]{0}', space=sflag, size = 0x4, scoped, tag = 'scoped memory for tpu_custom_call.1']
    #allocation4 [shape = 's32[1]{0}', space=sflag, size = 0x4, scoped, tag = 'scoped memory for tpu_custom_call.1']
    #allocation5 [shape = 'u8[16384]{0}', space=vmem, size = 0x4000, scoped, tag = 'input window, operand 1, single buffered']
    #allocation6 [shape = 's32[1]{0}', space=sflag, size = 0x4, scoped, tag = 'scoped memory for tpu_custom_call.1']
    #allocation7 [shape = 'u8[32768]{0}', space=vmem, size = 0x8000, scoped, tag = 'input window, operand 3, single buffered']
    #allocation8 [shape = 'u8[2048]{0}', space=vmem, size = 0x800, scoped, tag = 'output window, operand 0, single buffered']
    %10 = vsyncpa [#allocation3], 0
    %11 = vsyncpa [#allocation6], 0
    %12 = vsyncpa [#allocation4], 0
    // Predicated region
    $region2: #{tpu_custom_call.1} parent=1 // pred_check
      _
    $region3: #{tpu_custom_call.1} parent=1 // pred_check_branch
      %14 = sbr.rel (0) target = $region5
    $region4: #{tpu_custom_call.1} parent=1 // pred_region
      %s16 = ssub.s32 32, 32
      %17 = vsyncadd [#allocation3], %s16
      %s19 = sshll.u32 [#allocation2], 4
      %s20 = int_to_ptr.vmem [resolvable:$true] %s19
      %22 = dma.hbm_to_vmem [thread:$0]  %s0, 32, %s20, [#allocation3]
    $region5: #{tpu_custom_call.1} parent=1 // pred_fallthru
      _
    // Predicated region
    $region6: #{tpu_custom_call.1} parent=1 // pred_check
      _
    $region7: #{tpu_custom_call.1} parent=1 // pred_check_branch
      %24 = sbr.rel (0) target = $region9
    $region8: #{tpu_custom_call.1} parent=1 // pred_region
      %s26 = ssub.s32 512, 512
      %27 = vsyncadd [#allocation6], %s26
      %s28 = sshll.u32 [#allocation5], 4
      %s29 = int_to_ptr.vmem [resolvable:$true] %s28
      %34 = dma.hbm_to_vmem [thread:$0]  %s1, 512, %s29, [#allocation6], 128, 128, 8
    $region9: #{tpu_custom_call.1} parent=1 // pred_fallthru
      _
    // Predicated region
    $region10: #{tpu_custom_call.1} parent=1 // pred_check
      _
    $region11: #{tpu_custom_call.1} parent=1 // pred_check_branch
      %36 = sbr.rel (0) target = $region13
    $region12: #{tpu_custom_call.1} parent=1 // pred_region
      _
    $region13: #{tpu_custom_call.1} parent=1 // pred_fallthru
      _
    // Predicated region
    $region14: #{tpu_custom_call.1} parent=1 // pred_check
      _
    $region15: #{tpu_custom_call.1} parent=1 // pred_check_branch
      %38 = sbr.rel (0) target = $region17
    $region16: #{tpu_custom_call.1} parent=1 // pred_region
      %s40 = ssub.s32 1024, 1024
      %41 = vsyncadd [#allocation6], %s40
      %s42 = sshll.u32 [#allocation7], 4
      %s43 = int_to_ptr.vmem [resolvable:$true] %s42
      %48 = dma.hbm_to_vmem [thread:$0]  %s3, 1024, %s43, [#allocation6], 256, 256, 16
    $region17: #{tpu_custom_call.1} parent=1 // pred_fallthru
      _
    // Predicated region
    $region18: #{tpu_custom_call.1} parent=1 // pred_check
      _
    $region19: #{tpu_custom_call.1} parent=1 // pred_check_branch
      %50 = sbr.rel (0) target = $region21
    $region20: #{tpu_custom_call.1} parent=1 // pred_region
      _
    $region21: #{tpu_custom_call.1} parent=1 // pred_fallthru
      _
    // Predicated region
    $region22: #{tpu_custom_call.1} parent=1 // pred_check
      _
    $region23: #{tpu_custom_call.1} parent=1 // pred_check_branch
      %52 = sbr.rel (0) target = $region25
    $region24: #{tpu_custom_call.1} parent=1 // pred_region
      %53 = dma.done [#allocation3], 32
    $region25: #{tpu_custom_call.1} parent=1 // pred_fallthru
      _
    // Predicated region
    $region26: #{tpu_custom_call.1} parent=1 // pred_check
      _
    $region27: #{tpu_custom_call.1} parent=1 // pred_check_branch
      %55 = sbr.rel (0) target = $region29
    $region28: #{tpu_custom_call.1} parent=1 // pred_region
      %56 = dma.done [#allocation6], 512
    $region29: #{tpu_custom_call.1} parent=1 // pred_fallthru
      _
    // Predicated region
    $region30: #{tpu_custom_call.1} parent=1 // pred_check
      _
    $region31: #{tpu_custom_call.1} parent=1 // pred_check_branch
      %58 = sbr.rel (0) target = $region33
    $region32: #{tpu_custom_call.1} parent=1 // pred_region
      %59 = dma.done [#allocation6], 1024
    $region33: #{tpu_custom_call.1} parent=1 // pred_fallthru
      _
    %v60 = vld [vmem:[#allocation2] sm:$0x3]
    %v61 = vld [vmem:[#allocation5] sm:$0xff]
    %v62 = vld [vmem:[#allocation5 + $0x8] sm:$0xff]
    %v63 = vld [vmem:[#allocation5 + $0x10] sm:$0xff]
    %v64 = vld [vmem:[#allocation5 + $0x18] sm:$0xff]
    %v65 = vld [vmem:[%s2] sm:$0x1]
    %v67 = vlaneseq
    %v68 = vshrl.u32 %v67, 7
    %v69 = vsub.s32 0, %v68
    %v70 = vrot.slane %v65, %v69
    %vm72 = vcmask 261120
    %v74 = vsel %vm72, %v60, 0
    %76 = vmatprep.subr.mxu0 0.0
    %77 = vmatpush1.msra.mxu0 0.0
    %78 = vmatprep.subr.mxu0 0.0
    %79 = vmatpush1.msra.mxu0 0.0
    %80 = vmatprep.subr.mxu0 0.0
    %81 = vmatpush1.msra.mxu0 0.0
    %82 = vmatprep.subr.mxu0 0.0
    %83 = vmatpush1.msra.mxu0 0.0
    %84 = vmatprep.subr.mxu0 0.0
    %85 = vmatpush1.msra.mxu0 0.0
    %86 = vmatprep.subr.mxu0 0.0
    %87 = vmatpush1.msra.mxu0 0.0
    %88 = vmatprep.subr.mxu0 0.0
    %89 = vmatpush1.msra.mxu0 0.0
    %90 = vmatprep.subr.mxu0 0.0
    %91 = vmatpush1.msra.mxu0 0.0
    %92 = vmatprep.subr.mxu0 0.0
    %93 = vmatpush1.msra.mxu0 0.0
    %94 = vmatprep.subr.mxu0 0.0
    %95 = vmatpush1.msra.mxu0 0.0
    %96 = vmatprep.subr.mxu0 0.0
    %97 = vmatpush1.msra.mxu0 0.0
    %98 = vmatprep.subr.mxu0 0.0
    %99 = vmatpush1.msra.mxu0 0.0
    %100 = vmatprep.subr.mxu0 0.0
    %101 = vmatpush1.msra.mxu0 %v64
    %102 = vmatprep.subr.mxu0 0.0
    %103 = vmatpush1.msra.mxu0 %v63
    %104 = vmatprep.subr.mxu0 0.0
    %105 = vmatpush1.msra.mxu0 %v62
    %106 = vmatprep.subr.mxu0 0.0
    %107 = vmatpush1.msra.mxu0 %v61
    %108 = vmatprep.subr.mxu0 0.0
    %109 = vmatpush2.msra.mxu0 0.0
    %110 = vmatprep.subr.mxu0 0.0
    %111 = vmatpush2.msra.mxu0 0.0
    %112 = vmatprep.subr.mxu0 0.0
    %113 = vmatpush2.msra.mxu0 0.0
    %114 = vmatprep.subr.mxu0 0.0
    %115 = vmatpush2.msra.mxu0 0.0
    %116 = vmatprep.subr.mxu0 0.0
    %117 = vmatpush2.msra.mxu0 0.0
    %118 = vmatprep.subr.mxu0 0.0
    %119 = vmatpush2.msra.mxu0 0.0
    %120 = vmatprep.subr.mxu0 0.0
    %121 = vmatpush2.msra.mxu0 0.0
    %122 = vmatprep.subr.mxu0 0.0
    %123 = vmatpush2.msra.mxu0 0.0
    %124 = vmatprep.subr.mxu0 0.0
    %125 = vmatpush2.msra.mxu0 0.0
    %126 = vmatprep.subr.mxu0 0.0
    %127 = vmatpush2.msra.mxu0 0.0
    %128 = vmatprep.subr.mxu0 0.0
    %129 = vmatpush2.msra.mxu0 0.0
    %130 = vmatprep.subr.mxu0 0.0
    %131 = vmatpush2.msra.mxu0 0.0
    %132 = vmatprep.subr.mxu0 0.0
    %133 = vmatpush2.msra.mxu0 0.0
    %134 = vmatprep.subr.mxu0 0.0
    %135 = vmatpush2.msra.mxu0 0.0
    %136 = vmatprep.subr.mxu0 0.0
    %137 = vmatpush2.msra.mxu0 0.0
    %138 = vmatprep.subr.mxu0 0.0
    %139 = vmatpush2.msra.mxu0 0.0
    %140 = vmatprep.mubr.f32.mxu0 0.0
    %141 = vmatmul.mubr.f32.gmra.mxu0 %v74
    %v142 = vpop.f32.mrf.mxu0
    %v143 = vadd.f32 %v70, %v142
    %v144 = vpop.f32.mrf.mxu0
    %145 = vdwg.mxu0
    %v146 = vxor.u32 %v143, 2147483648
    %v147 = vmul.f32 %v146, 1.442695
    %v148 = vpow.pop %v147
    %v149 = vadd.f32 %v148, 1.0
    %v150 = vrcp.pop %v149
    %v151 = vmul.f32 1.0, %v150
    %v152 = vmul.f32 %v143, %v151
    %v153 = vld [vmem:[#allocation7] sm:$0xff]
    %v154 = vld [vmem:[#allocation7 + $0x8] sm:$0xff]
    %v155 = vld [vmem:[#allocation7 + $0x10] sm:$0xff]
    %v156 = vld [vmem:[#allocation7 + $0x18] sm:$0xff]
    %v157 = vld [vmem:[#allocation7 + $0x20] sm:$0xff]
    %v158 = vld [vmem:[#allocation7 + $0x28] sm:$0xff]
    %v159 = vld [vmem:[#allocation7 + $0x30] sm:$0xff]
    %v160 = vld [vmem:[#allocation7 + $0x38] sm:$0xff]
    %v161 = vld [vmem:[%s4] sm:$0x3]
    %v163 = vlaneseq
    %v164 = vshrl.u32 %v163, 7
    %v165 = vsub.s32 0, %v164
    %v166 = vrot.slane %v161, %v165
    %v167 = vlaneseq
    %v168 = vshrl.u32 %v167, 7
    %v169 = vsub.s32 1, %v168
    %v170 = vrot.slane %v161, %v169
    %v174 = vsel %vm72, %v152, 0
    %176 = vmatprep.subr.mxu0 0.0
    %177 = vmatpush1.msra.mxu0 0.0
    %178 = vmatprep.subr.mxu0 0.0
    %179 = vmatpush1.msra.mxu0 0.0
    %180 = vmatprep.subr.mxu0 0.0
    %181 = vmatpush1.msra.mxu0 0.0
    %182 = vmatprep.subr.mxu0 0.0
    %183 = vmatpush1.msra.mxu0 0.0
    %184 = vmatprep.subr.mxu0 0.0
    %185 = vmatpush1.msra.mxu0 0.0
    %186 = vmatprep.subr.mxu0 0.0
    %187 = vmatpush1.msra.mxu0 0.0
    %188 = vmatprep.subr.mxu0 0.0
    %189 = vmatpush1.msra.mxu0 0.0
    %190 = vmatprep.subr.mxu0 0.0
    %191 = vmatpush1.msra.mxu0 0.0
    %192 = vmatprep.subr.mxu0 0.0
    %193 = vmatpush1.msra.mxu0 0.0
    %194 = vmatprep.subr.mxu0 0.0
    %195 = vmatpush1.msra.mxu0 0.0
    %196 = vmatprep.subr.mxu0 0.0
    %197 = vmatpush1.msra.mxu0 0.0
    %198 = vmatprep.subr.mxu0 0.0
    %199 = vmatpush1.msra.mxu0 0.0
    %200 = vmatprep.subr.mxu0 %v160
    %201 = vmatpush1.msra.mxu0 %v159
    %202 = vmatprep.subr.mxu0 %v158
    %203 = vmatpush1.msra.mxu0 %v157
    %204 = vmatprep.subr.mxu0 %v156
    %205 = vmatpush1.msra.mxu0 %v155
    %206 = vmatprep.subr.mxu0 %v154
    %207 = vmatpush1.msra.mxu0 %v153
    %208 = vmatprep.subr.mxu0 0.0
    %209 = vmatpush2.msra.mxu0 0.0
    %210 = vmatprep.subr.mxu0 0.0
    %211 = vmatpush2.msra.mxu0 0.0
    %212 = vmatprep.subr.mxu0 0.0
    %213 = vmatpush2.msra.mxu0 0.0
    %214 = vmatprep.subr.mxu0 0.0
    %215 = vmatpush2.msra.mxu0 0.0
    %216 = vmatprep.subr.mxu0 0.0
    %217 = vmatpush2.msra.mxu0 0.0
    %218 = vmatprep.subr.mxu0 0.0
    %219 = vmatpush2.msra.mxu0 0.0
    %220 = vmatprep.subr.mxu0 0.0
    %221 = vmatpush2.msra.mxu0 0.0
    %222 = vmatprep.subr.mxu0 0.0
    %223 = vmatpush2.msra.mxu0 0.0
    %224 = vmatprep.subr.mxu0 0.0
    %225 = vmatpush2.msra.mxu0 0.0
    %226 = vmatprep.subr.mxu0 0.0
    %227 = vmatpush2.msra.mxu0 0.0
    %228 = vmatprep.subr.mxu0 0.0
    %229 = vmatpush2.msra.mxu0 0.0
    %230 = vmatprep.subr.mxu0 0.0
    %231 = vmatpush2.msra.mxu0 0.0
    %232 = vmatprep.subr.mxu0 0.0
    %233 = vmatpush2.msra.mxu0 0.0
    %234 = vmatprep.subr.mxu0 0.0
    %235 = vmatpush2.msra.mxu0 0.0
    %236 = vmatprep.subr.mxu0 0.0
    %237 = vmatpush2.msra.mxu0 0.0
    %238 = vmatprep.subr.mxu0 0.0
    %239 = vmatpush2.msra.mxu0 0.0
    %240 = vmatprep.mubr.f32.mxu0 0.0
    %241 = vmatmul.mubr.f32.gmra.mxu0 %v174
    %v242 = vpop.f32.mrf.mxu0
    %v243 = vadd.f32 %v166, %v242
    %v244 = vpop.f32.mrf.mxu0
    %v245 = vadd.f32 %v170, %v244
    %246 = vdwg.mxu0
    %v249 = vcombine.low %v243, %v245
    %v251 = vunpack.c.l.s4 1983009808
    %v252 = vunpack.c.0.s8 %v251
    %v253 = vlaneseq
    %v254 = vshrl.u32 %v253, 7
    %v255 = vsub.s32 %v252, %v254
    %v256 = vrot.slane %v249, %v255
    %vm258 = vcmask 1041408
    %vm259 = vcmask 519170
    %vm260 = vmor %vm259, %vm258
    %261 = vst.msk [vmem:[#allocation8] sm:$0xf] %vm260, %v256
    // Predicated region
    $region34: #{tpu_custom_call.1} parent=1 // pred_check
      _
    $region35: #{tpu_custom_call.1} parent=1 // pred_check_branch
      %263 = sbr.rel (0) target = $region37
    $region36: #{tpu_custom_call.1} parent=1 // pred_region
      %s265 = ssub.s32 64, 64
      %266 = vsyncadd [#allocation4], %s265
      %s268 = sshll.u32 [#allocation8], 4
      %s269 = int_to_ptr.vmem [resolvable:$true] %s268
      %271 = dma.vmem_to_hbm [thread:$0]  %s269, 64, %s5, [#allocation4]
    $region37: #{tpu_custom_call.1} parent=1 // pred_fallthru
      _
    // Predicated region
    $region38: #{tpu_custom_call.1} parent=1 // pred_check
      _
    $region39: #{tpu_custom_call.1} parent=1 // pred_check_branch
      %273 = sbr.rel (0) target = $region41
    $region40: #{tpu_custom_call.1} parent=1 // pred_region
      %274 = dma.done [#allocation4], 64
    $region41: #{tpu_custom_call.1} parent=1 // pred_fallthru
      _
    %275 = vsyncpa [#allocation3], 1
    %276 = vsyncpa [#allocation6], 1
    %277 = vsyncpa [#allocation4], 1

</llo_original>
